<compile_context>
chip_gen: v7x
topology: tpu7x:2x2x1
jax: 0.10.0
libtpu: 0.0.40
codegen_flags: <defaults>
</compile_context>

<pallas_src>
import functools

import jax
import jax.numpy as jnp
from jax.experimental import pallas as pl
from jax.experimental.pallas import tpu as pltpu

_LANE = 128      # TPU lane width (last-dim vreg width)
_SUBLANE = 8     # TPU sublane width (second-to-last dim)
# Conservative scoped-VMEM budget: v5e default is 16 MiB; v6e/v7x default to
# 32 MiB, so sizing tiles against 16 MiB is always safe without flag overrides.
_VMEM_BUDGET = 16 * 1024 * 1024
_MAX_TB = 1024   # rows >= ~512 already reach ~85% of HBM roofline
# Below this many input elements, a plain XLA matmul beats the kernel launch.
_FAST_PATH_ELEMS = 128 * 128


def _linear_kernel(x_ref, w_ref, b_ref, o_ref, *, out_features):
    # x_ref: (TB, F) f32, w_ref: (F, N_pad) f32 (lane-padded, zero cols),
    # b_ref: (1, N_pad) f32, o_ref: (TB, out_features) f32.
    acc = jnp.dot(x_ref[...], w_ref[...], preferred_element_type=jnp.float32)
    acc = acc + b_ref[...]
    # Only the real output columns are stored to HBM (masked vst is free here:
    # the store slot has huge slack in an HBM-bound kernel).
    o_ref[...] = acc[:, :out_features].astype(o_ref.dtype)


def prepare_params(weight, bias):
    """One-time layout plumbing (hoisted out of the per-call path).

    weight: (out_features, in_features)  -- PyTorch nn.Linear convention
    bias:   (out_features,)
    Returns (w_padded, b_padded): (F, N_pad) and (1, N_pad) with N_pad a
    multiple of 128, extra columns zero.  Re-run if weights change (training).
    """
    out_features, in_features = weight.shape
    n_pad = pl.cdiv(out_features, _LANE) * _LANE
    w_padded = (
        jnp.zeros((in_features, n_pad), weight.dtype)
        .at[:, :out_features]
        .set(weight.T)
    )
    b_padded = jnp.zeros((1, n_pad), bias.dtype).at[0, :out_features].set(bias)
    return w_padded, b_padded


def _pick_tile_b(B, F, n_pad, out_features, itemsize):
    """Batch-tile rows sized against the scoped-VMEM budget (all static ints)."""
    # Everything below is double-buffered by the BlockSpec pipeline:
    #   x: TB*F, weight: F*n_pad, bias: n_pad, out: TB*out_features
    resident = 2 * (F * n_pad + n_pad) * itemsize
    avail = max(_VMEM_BUDGET - resident, 0)
    tb = avail // (2 * itemsize * (F + out_features))
    tb = min(tb, _MAX_TB, B)
    # v7x megacore: ensure >=2 grid steps when there is enough batch so the
    # "parallel" axis is actually sharded across both TensorCores.
    if B >= 2 * _SUBLANE:
        tb = min(tb, pl.cdiv(B, 2))
    tb = max(_SUBLANE, (tb // _SUBLANE) * _SUBLANE)
    return int(tb)


@functools.partial(jax.jit, static_argnames=("out_features", "force_pallas"))
def pred_forward(x, w_padded, b_padded, out_features, force_pallas=False):
    """x: (B, F) f32; w_padded: (F, N_pad); b_padded: (1, N_pad)."""
    B, F = x.shape
    n_pad = w_padded.shape[1]
    itemsize = x.dtype.itemsize

    # Tiny-input fast path: launch + per-step overhead dominates, plain XLA
    # matmul wins.  (Demo passes force_pallas=True to exercise the kernel.)
    if (not force_pallas) and (B * F <= _FAST_PATH_ELEMS):
        return x @ w_padded[:, :out_features] + b_padded[0, :out_features]

    TB = _pick_tile_b(B, F, n_pad, out_features, itemsize)
    grid = (pl.cdiv(B, TB),)

    kernel = functools.partial(_linear_kernel, out_features=out_features)
    out = pl.pallas_call(
        kernel,
        out_shape=jax.ShapeDtypeStruct((B, out_features), x.dtype),
        grid_spec=pl.GridSpec(
            grid=grid,
            in_specs=[
                pl.BlockSpec((TB, F), lambda i: (i, 0)),      # x tile (streamed)
                pl.BlockSpec((F, n_pad), lambda i: (0, 0)),   # weight (resident)
                pl.BlockSpec((1, n_pad), lambda i: (0, 0)),   # bias (resident)
            ],
            out_specs=pl.BlockSpec((TB, out_features), lambda i: (i, 0)),
        ),
        compiler_params=pltpu.CompilerParams(
            # Batch tiles are independent -> shard across TCs on v7x.
            dimension_semantics=("parallel",),
        ),
        cost_estimate=pl.CostEstimate(
            flops=2 * B * F * out_features,
            transcendentals=0,
            bytes_accessed=(B * F + F * n_pad + n_pad + B * out_features)
            * itemsize,
        ),
    )(x, w_padded, b_padded)
    return out


if __name__ == "__main__":
    key = jax.random.PRNGKey(0)
    kx, kw, kb = jax.random.split(key, 3)

    batch = 8
    input_size = 32
    out_features = 10

    x = jax.random.normal(kx, (batch, input_size), dtype=jnp.float32)

    # Deterministic parameter init mirroring nn.Linear's uniform(-1/sqrt(F), 1/sqrt(F))
    bound = 1.0 / jnp.sqrt(jnp.float32(input_size))
    weight = jax.random.uniform(
        kw, (out_features, input_size), minval=-bound, maxval=bound, dtype=jnp.float32
    )
    bias = jax.random.uniform(
        kb, (out_features,), minval=-bound, maxval=bound, dtype=jnp.float32
    )

    # One-time layout plumbing (outside the forward path).
    w_padded, b_padded = prepare_params(weight, bias)
    w_padded, b_padded = jax.block_until_ready((w_padded, b_padded))

    # Pallas path (forced at this small demo shape so the kernel runs).
    out = pred_forward(x, w_padded, b_padded, out_features, force_pallas=True)
    out = jax.block_until_ready(out)

    # Fast path (what would be used at this tiny shape in production).
    out_fast = pred_forward(x, w_padded, b_padded, out_features)
    out_fast = jax.block_until_ready(out_fast)

    # Reference check against plain JAX
    ref = x @ weight.T + bias
    assert out.shape == (batch, out_features)
    assert jnp.allclose(out, ref, atol=1e-5, rtol=1e-5), "pallas mismatch vs reference"
    assert jnp.allclose(out_fast, ref, atol=1e-5, rtol=1e-5), "fast path mismatch"

    print("KERNEL_OK")
</pallas_src>

<mosaic_0001>
module attributes {stable_mosaic.version = 11 : i64} {
  func.func @_linear_kernel(%arg0: i32, %arg1: memref<8x32xf32, #tpu.memory_space<vmem>>, %arg2: memref<32x128xf32, #tpu.memory_space<vmem>>, %arg3: memref<1x128xf32, #tpu.memory_space<vmem>>, %arg4: memref<8x10xf32, #tpu.memory_space<vmem>>) attributes {dimension_semantics = [#tpu.dimension_semantics<parallel>], iteration_bounds = array<i64: 1>, scalar_prefetch = 0 : i64, scratch_operands = 0 : i64, tpu.core_type = #tpu.core_type<tc>, window_params = [{transform_indices = @transform_0, window_bounds = array<i64: 8, 32>}, {pipeline_mode = #tpu.pipeline_mode<synchronous>, transform_indices = @transform_1, window_bounds = array<i64: 32, 128>}, {pipeline_mode = #tpu.pipeline_mode<synchronous>, transform_indices = @transform_2, window_bounds = array<i64: 1, 128>}, {transform_indices = @transform_3, window_bounds = array<i64: 8, 10>}]} {
    %c0 = arith.constant 0 : index
    %c0_0 = arith.constant 0 : index
    %0 = vector.load %arg1[%c0, %c0_0] : memref<8x32xf32, #tpu.memory_space<vmem>>, vector<8x32xf32>
    %c0_1 = arith.constant 0 : index
    %c0_2 = arith.constant 0 : index
    %1 = vector.load %arg2[%c0_1, %c0_2] : memref<32x128xf32, #tpu.memory_space<vmem>>, vector<32x128xf32>
    %cst = arith.constant dense<0.000000e+00> : vector<8x128xf32>
    %2 = tpu.matmul %0, %1, %cst {dimension_numbers = #tpu.dot_dimension_numbers<[1], [0], [0], [1], [0, 0, 1, 1], [], []>} : vector<8x32xf32>, vector<32x128xf32>, vector<8x128xf32> -> vector<8x128xf32>
    %c0_3 = arith.constant 0 : index
    %c0_4 = arith.constant 0 : index
    %3 = vector.load %arg3[%c0_3, %c0_4] : memref<1x128xf32, #tpu.memory_space<vmem>>, vector<1x128xf32>
    %4 = vector.broadcast %3 : vector<1x128xf32> to vector<8x128xf32>
    %5 = arith.addf %2, %4 : vector<8x128xf32>
    %6 = vector.extract_strided_slice %5 {offsets = [0, 0], sizes = [8, 10], strides = [1, 1]} : vector<8x128xf32> to vector<8x10xf32>
    %c0_5 = arith.constant 0 : index
    %c0_6 = arith.constant 0 : index
    %7 = vector.load %arg4[%c0_5, %c0_6] : memref<8x10xf32, #tpu.memory_space<vmem>>, vector<8x10xf32>
    tpu.vector_store %arg4[%c0_5, %c0_6], %6 {strides = array<i32>} : memref<8x10xf32, #tpu.memory_space<vmem>>, vector<8x10xf32>,
    return
  }
  func.func @transform_0(%arg0: i32) -> (i32, i32) {
    %c0_i32 = arith.constant 0 : i32
    %c0_i32_0 = arith.constant 0 : i32
    return %arg0, %c0_i32 : i32, i32
  }
  func.func @transform_1(%arg0: i32) -> (i32, i32) {
    %c0_i32 = arith.constant 0 : i32
    %c0_i32_0 = arith.constant 0 : i32
    %c0_i32_1 = arith.constant 0 : i32
    return %c0_i32, %c0_i32_0 : i32, i32
  }
  func.func @transform_2(%arg0: i32) -> (i32, i32) {
    %c0_i32 = arith.constant 0 : i32
    %c0_i32_0 = arith.constant 0 : i32
    %c0_i32_1 = arith.constant 0 : i32
    return %c0_i32, %c0_i32_0 : i32, i32
  }
  func.func @transform_3(%arg0: i32) -> (i32, i32) {
    %c0_i32 = arith.constant 0 : i32
    %c0_i32_0 = arith.constant 0 : i32
    return %arg0, %c0_i32 : i32, i32
  }
}

</mosaic_0001>

<llo_original>
// kernel: pred_forward.1
$region0: #{pred_forward.1}
  #allocation0 [shape = 'u32[]', space=smem, size = 0x4, offset = 0x4, fixed_abs, tag = 'smem constant byte address 0x4 - core index']
  #allocation1 [shape = 'u32[144,128]{1,0:T(1,128)}', space=vmem, size = 0x12000, scoped, tag = 'internal scratch']
  %s0 = inlined_call_operand.hbm [shape: f32[8,32], index: 0, kind: input, shape index: {}]
  %s1 = inlined_call_operand.hbm [shape: f32[32,128], index: 1, kind: input, shape index: {}]
  %s2 = inlined_call_operand.vmem [shape: f32[1,128], index: 2, kind: input, shape index: {}]
  %s3 = inlined_call_operand.hbm [shape: f32[8,10], index: 3, kind: output, shape index: {}]
  %s4 = sld [smem:[#allocation0]]
  $region30: #{pred_forward.1} parent=0
    _
  %s6 = ssub.s32 1, %s4
  %s7 = scalar_select 0, %s6, %s4
  $region1: #{pred_forward.1} parent=0
    #allocation2 [shape = 'u8[4096]{0}', space=vmem, size = 0x1000, scoped, tag = 'input window, operand 0, single buffered']
    #allocation3 [shape = 's32[1]{0}', space=sflag, size = 0x4, scoped, tag = 'scoped memory for pred_forward.1']
    #allocation4 [shape = 's32[1]{0}', space=sflag, size = 0x4, scoped, tag = 'scoped memory for pred_forward.1']
    #allocation5 [shape = 'u8[16384]{0}', space=vmem, size = 0x4000, scoped, tag = 'input window, operand 1, single buffered']
    #allocation6 [shape = 's32[1]{0}', space=sflag, size = 0x4, scoped, tag = 'scoped memory for pred_forward.1']
    #allocation7 [shape = 'u8[4096]{0}', space=vmem, size = 0x1000, scoped, tag = 'output window, operand 0, single buffered']
    %8 = vsyncpa [#allocation3], 0
    %9 = vsyncpa [#allocation6], 0
    %10 = vsyncpa [#allocation4], 0
    // Predicated region
    $region2: #{pred_forward.1} parent=1 // pred_check
      _
    $region3: #{pred_forward.1} parent=1 // pred_check_branch
      %12 = sbr.rel (0) target = $region5
    $region4: #{pred_forward.1} parent=1 // pred_region
      %s14 = ssub.s32 128, 128
      %15 = vsyncadd [#allocation3], %s14
      %s17 = sshll.u32 [#allocation2], 4
      %s18 = int_to_ptr.vmem [resolvable:$true] %s17
      %20 = dma.hbm_to_vmem [thread:$0]  %s0, 128, %s18, [#allocation3]
    $region5: #{pred_forward.1} parent=1 // pred_fallthru
      _
    // Predicated region
    $region6: #{pred_forward.1} parent=1 // pred_check
      _
    $region7: #{pred_forward.1} parent=1 // pred_check_branch
      %22 = sbr.rel (0) target = $region9
    $region8: #{pred_forward.1} parent=1 // pred_region
      %s24 = ssub.s32 512, 512
      %25 = vsyncadd [#allocation6], %s24
      %s26 = sshll.u32 [#allocation5], 4
      %s27 = int_to_ptr.vmem [resolvable:$true] %s26
      %32 = dma.hbm_to_vmem [thread:$0]  %s1, 512, %s27, [#allocation6], 128, 128, 8
    $region9: #{pred_forward.1} parent=1 // pred_fallthru
      _
    // Predicated region
    $region10: #{pred_forward.1} parent=1 // pred_check
      _
    $region11: #{pred_forward.1} parent=1 // pred_check_branch
      %34 = sbr.rel (0) target = $region13
    $region12: #{pred_forward.1} parent=1 // pred_region
      _
    $region13: #{pred_forward.1} parent=1 // pred_fallthru
      _
    // Predicated region
    $region14: #{pred_forward.1} parent=1 // pred_check
      _
    $region15: #{pred_forward.1} parent=1 // pred_check_branch
      %36 = sbr.rel (0) target = $region17
    $region16: #{pred_forward.1} parent=1 // pred_region
      %37 = dma.done [#allocation3], 128
    $region17: #{pred_forward.1} parent=1 // pred_fallthru
      _
    // Predicated region
    $region18: #{pred_forward.1} parent=1 // pred_check
      _
    $region19: #{pred_forward.1} parent=1 // pred_check_branch
      %39 = sbr.rel (0) target = $region21
    $region20: #{pred_forward.1} parent=1 // pred_region
      %40 = dma.done [#allocation6], 512
    $region21: #{pred_forward.1} parent=1 // pred_fallthru
      _
    %v41 = vld [vmem:[#allocation2] sm:$0xff]
    %v42 = vld [vmem:[#allocation5] sm:$0xff]
    %v43 = vld [vmem:[#allocation5 + $0x8] sm:$0xff]
    %v44 = vld [vmem:[#allocation5 + $0x10] sm:$0xff]
    %v45 = vld [vmem:[#allocation5 + $0x18] sm:$0xff]
    %v46 = vld [vmem:[%s2] sm:$0x1]
    %v48 = vlaneseq
    %v49 = vshrl.u32 %v48, 7
    %v50 = vsub.s32 0, %v49
    %v51 = vrot.slane %v46, %v50
    %vm53 = vcmask 261120
    %v55 = vsel %vm53, %v41, 0
    %57 = vmatprep.subr.mxu0 0.0
    %58 = vmatpush1.msra.mxu0 %v42
    %59 = vmatprep.subr.mxu0 0.0
    %60 = vmatpush1.msra.mxu0 %v43
    %61 = vmatprep.subr.mxu0 0.0
    %62 = vmatpush1.msra.mxu0 %v44
    %63 = vmatprep.subr.mxu0 0.0
    %64 = vmatpush1.msra.mxu0 %v45
    %65 = vmatprep.subr.mxu0 0.0
    %66 = vmatpush1.msra.mxu0 0.0
    %67 = vmatprep.subr.mxu0 0.0
    %68 = vmatpush1.msra.mxu0 0.0
    %69 = vmatprep.subr.mxu0 0.0
    %70 = vmatpush1.msra.mxu0 0.0
    %71 = vmatprep.subr.mxu0 0.0
    %72 = vmatpush1.msra.mxu0 0.0
    %73 = vmatprep.subr.mxu0 0.0
    %74 = vmatpush1.msra.mxu0 0.0
    %75 = vmatprep.subr.mxu0 0.0
    %76 = vmatpush1.msra.mxu0 0.0
    %77 = vmatprep.subr.mxu0 0.0
    %78 = vmatpush1.msra.mxu0 0.0
    %79 = vmatprep.subr.mxu0 0.0
    %80 = vmatpush1.msra.mxu0 0.0
    %81 = vmatprep.subr.mxu0 0.0
    %82 = vmatpush1.msra.mxu0 0.0
    %83 = vmatprep.subr.mxu0 0.0
    %84 = vmatpush1.msra.mxu0 0.0
    %85 = vmatprep.subr.mxu0 0.0
    %86 = vmatpush1.msra.mxu0 0.0
    %87 = vmatprep.subr.mxu0 0.0
    %88 = vmatpush1.msra.mxu0 0.0
    %89 = vmatprep.subr.mxu0 0.0
    %90 = vmatpush1.msra.mxu0 0.0
    %91 = vmatprep.subr.mxu0 0.0
    %92 = vmatpush1.msra.mxu0 0.0
    %93 = vmatprep.subr.mxu0 0.0
    %94 = vmatpush1.msra.mxu0 0.0
    %95 = vmatprep.subr.mxu0 0.0
    %96 = vmatpush1.msra.mxu0 0.0
    %97 = vmatprep.subr.mxu0 0.0
    %98 = vmatpush1.msra.mxu0 0.0
    %99 = vmatprep.subr.mxu0 0.0
    %100 = vmatpush1.msra.mxu0 0.0
    %101 = vmatprep.subr.mxu0 0.0
    %102 = vmatpush1.msra.mxu0 0.0
    %103 = vmatprep.subr.mxu0 0.0
    %104 = vmatpush1.msra.mxu0 0.0
    %105 = vmatprep.subr.mxu0 0.0
    %106 = vmatpush1.msra.mxu0 0.0
    %107 = vmatprep.subr.mxu0 0.0
    %108 = vmatpush1.msra.mxu0 0.0
    %109 = vmatprep.subr.mxu0 0.0
    %110 = vmatpush1.msra.mxu0 0.0
    %111 = vmatprep.subr.mxu0 0.0
    %112 = vmatpush1.msra.mxu0 0.0
    %113 = vmatprep.subr.mxu0 0.0
    %114 = vmatpush1.msra.mxu0 0.0
    %115 = vmatprep.subr.mxu0 0.0
    %116 = vmatpush1.msra.mxu0 0.0
    %117 = vmatprep.subr.mxu0 0.0
    %118 = vmatpush1.msra.mxu0 0.0
    %119 = vmatprep.subr.mxu0 0.0
    %120 = vmatpush1.msra.mxu0 0.0
    %121 = vmatprep.mubr.f32.mxu0 0.0
    %122 = vmatmul.mubr.f32.gmra.mrb[0].mxu0 %v55
    %v123 = vpop.f32.mrb[0].mxu0
    %v124 = vadd.f32 %v51, %v123
    %v125 = vpop.f32.mrb[0].mxu0
    %126 = vdwg.mxu0
    %vm127 = vcmask 80896
    %128 = vst.msk [vmem:[#allocation7] sm:$0xff] %vm127, %v124
    // Predicated region
    $region22: #{pred_forward.1} parent=1 // pred_check
      _
    $region23: #{pred_forward.1} parent=1 // pred_check_branch
      %130 = sbr.rel (0) target = $region25
    $region24: #{pred_forward.1} parent=1 // pred_region
      %s132 = ssub.s32 128, 128
      %133 = vsyncadd [#allocation4], %s132
      %s135 = sshll.u32 [#allocation7], 4
      %s136 = int_to_ptr.vmem [resolvable:$true] %s135
      %138 = dma.vmem_to_hbm [thread:$0]  %s136, 128, %s3, [#allocation4]
    $region25: #{pred_forward.1} parent=1 // pred_fallthru
      _
    // Predicated region
    $region26: #{pred_forward.1} parent=1 // pred_check
      _
    $region27: #{pred_forward.1} parent=1 // pred_check_branch
      %140 = sbr.rel (0) target = $region29
    $region28: #{pred_forward.1} parent=1 // pred_region
      %141 = dma.done [#allocation4], 128
    $region29: #{pred_forward.1} parent=1 // pred_fallthru
      _
    %142 = vsyncpa [#allocation3], 1
    %143 = vsyncpa [#allocation6], 1
    %144 = vsyncpa [#allocation4], 1

</llo_original>
